<compile_context>
chip_gen: v6e
topology: v6e:2x2x1
jax: 0.10.0
libtpu: 0.0.40
codegen_flags: <defaults>
</compile_context>

<pallas_src>
import math

import jax
import jax.numpy as jnp
from jax.experimental import pallas as pl
from jax.experimental.pallas import tpu as pltpu

LANE = 128                      # TPU lane width
COMPUTE_DTYPE = jnp.bfloat16    # MXU operand dtype (accumulation stays f32)
OUT_DTYPE = jnp.float32         # kernel output dtype (set to bf16 to halve writeback)


# ------------------------------- helpers ----------------------------------- #

def _round_up(n, m):
    return ((n + m - 1) // m) * m


def _batch_tile(B):
    """Batch tile: multiple of 8 sublanes, <=256, >=2 grid steps when B >= 16."""
    b8 = _round_up(B, 8)
    if b8 <= 16:
        return b8                                           # tiny batch: one tile
    if b8 <= 512:
        return min(256, _round_up(pl.cdiv(b8, 2), 8))       # 2 steps -> both v7x TCs busy
    # large batch: 128 or 256, whichever wastes fewer padded rows (tie -> 256)
    return min((128, 256), key=lambda t: (_round_up(b8, t) - b8, -t))


# ------------------------------ fused kernel -------------------------------- #

def _make_fused_kernel(proj_flags):
    """proj_flags[i]: block i's first matmul is the fused 256-wide [w1 | ws] pass.
    (Always True for block 0, which uses ws = I when in_f == out_f.)"""
    n_blocks = len(proj_flags)

    def kernel(x_ref, wf_ref, w_ref, b_ref, lw_ref, lb_ref, out_ref):
        # ---- block 0: LHS is raw bf16 x (K = real input dim), fused [w1 | ws] ----
        r = jnp.dot(x_ref[...], wf_ref[...], preferred_element_type=jnp.float32)
        a = jnp.maximum(r[:, :LANE] + b_ref[0:1, :], 0.0)
        out = jnp.dot(a.astype(COMPUTE_DTYPE), w_ref[0:LANE, :LANE],
                      preferred_element_type=jnp.float32)
        h32 = jnp.maximum(out + b_ref[1:2, :] + r[:, LANE:], 0.0)

        # ---- blocks 1..n-1: feature dims live zero-padded to 128 lanes ----
        row = 1
        for bi in range(1, n_blocks):
            proj = proj_flags[bi]
            h_lo = h32.astype(COMPUTE_DTYPE)
            r0 = row * LANE
            if proj:
                r = jnp.dot(h_lo, w_ref[r0:r0 + LANE, :],
                            preferred_element_type=jnp.float32)
                sc = r[:, LANE:]                       # shortcut from the fused pass
            else:
                r = jnp.dot(h_lo, w_ref[r0:r0 + LANE, :LANE],
                            preferred_element_type=jnp.float32)
                sc = h32                               # identity shortcut, exact f32
            a = jnp.maximum(r[:, :LANE] + b_ref[2 * bi:2 * bi + 1, :], 0.0)
            out = jnp.dot(a.astype(COMPUTE_DTYPE),
                          w_ref[r0 + LANE:r0 + 2 * LANE, :LANE],
                          preferred_element_type=jnp.float32)
            h32 = jnp.maximum(out + b_ref[2 * bi + 1:2 * bi + 2, :] + sc, 0.0)
            row += 2

        # ---- final Linear(64 -> dictionary_dim) ----
        out_ref[...] = (
            jnp.dot(h32.astype(COMPUTE_DTYPE), lw_ref[...],
                    preferred_element_type=jnp.float32) + lb_ref[...]
        ).astype(out_ref.dtype)

    return kernel


# --------------------------- parameter handling ----------------------------- #

def _init_linear(key, out_f, in_f):
    """PyTorch nn.Linear default init: uniform(-1/sqrt(in), 1/sqrt(in))."""
    kw, kb = jax.random.split(key)
    bound = 1.0 / math.sqrt(in_f)
    w = jax.random.uniform(kw, (out_f, in_f), jnp.float32, -bound, bound)
    b = jax.random.uniform(kb, (out_f,), jnp.float32, -bound, bound)
    return w, b


def make_resnet_params(key, num_blocks, input_dim, dictionary_dim=128):
    """Mirror ResNet.__init__: layer1->16, layer2->32, layer3->64, linear->dictionary_dim."""
    params = {"blocks": []}
    in_f = input_dim
    for out_f, n in zip((16, 32, 64), num_blocks):
        for _ in range(n):
            key, k1, k2, k3 = jax.random.split(key, 4)
            w1, b1 = _init_linear(k1, out_f, in_f)
            w2, b2 = _init_linear(k2, out_f, out_f)
            if in_f != out_f:
                ws, bs = _init_linear(k3, out_f, in_f)
            else:
                ws, bs = None, None
            params["blocks"].append(
                {"w1": w1, "b1": b1, "w2": w2, "b2": b2, "ws": ws, "bs": bs})
            in_f = out_f
    key, kl = jax.random.split(key)
    params["linear_w"], params["linear_b"] = _init_linear(kl, dictionary_dim, 64)
    return params


def prepack_params(raw):
    """Pack the whole network into 5 VMEM-resident arrays.

    Invariant: every lane/row outside the real feature extents is zero, so padded lanes
    stay zero through ReLU and residual adds inside the kernel.
    """
    blocks = raw["blocks"]

    # --- block 0: fused [w1 | ws-or-I], K = real input dim (unpadded) ---
    blk0 = blocks[0]
    out0, din = blk0["w1"].shape
    wf = jnp.zeros((din, 2 * LANE), jnp.float32)
    wf = wf.at[:, :out0].set(blk0["w1"].T)
    if blk0["ws"] is not None:
        wf = wf.at[:, LANE:LANE + out0].set(blk0["ws"].T)
        bs0 = blk0["bs"]
    else:                                   # identity shortcut expressed as exact I-matmul
        wf = wf.at[:din, LANE:LANE + din].set(jnp.eye(din, dtype=jnp.float32))
        bs0 = jnp.zeros((out0,), jnp.float32)

    def _chunk(wT, in_f, out_f, wsT=None):
        c = jnp.zeros((LANE, 2 * LANE), jnp.float32)
        c = c.at[:in_f, :out_f].set(wT)
        if wsT is not None:
            c = c.at[:in_f, LANE:LANE + out_f].set(wsT)
        return c

    def _bias_row(b):
        return jnp.zeros((LANE,), jnp.float32).at[:b.shape[0]].set(b)

    proj_flags = [True]
    chunks = [_chunk(blk0["w2"].T, out0, out0)]            # block-0 second matmul
    biases = [_bias_row(blk0["b1"]), _bias_row(blk0["b2"] + bs0)]

    in_f = out0
    for blk in blocks[1:]:
        out_f = blk["w1"].shape[0]
        proj = blk["ws"] is not None
        proj_flags.append(proj)
        chunks.append(_chunk(blk["w1"].T, in_f, out_f, blk["ws"].T if proj else None))
        chunks.append(_chunk(blk["w2"].T, out_f, out_f))
        biases.append(_bias_row(blk["b1"]))
        biases.append(_bias_row(blk["b2"] + (blk["bs"] if proj else 0.0)))
        in_f = out_f

    w_slab = jnp.concatenate(chunks, axis=0).astype(COMPUTE_DTYPE)   # (n_chunks*128, 256)
    b_slab = jnp.stack(biases, axis=0)                               # (2*n_blocks, 128) f32

    # --- final Linear(64 -> dictionary_dim) ---
    dict_dim, lin_in = raw["linear_w"].shape
    dict_pad = _round_up(dict_dim, LANE)
    lw = jnp.zeros((LANE, dict_pad), jnp.float32).at[:lin_in, :dict_dim].set(raw["linear_w"].T)
    lb = jnp.zeros((1, dict_pad), jnp.float32).at[0, :dict_dim].set(raw["linear_b"])

    return {
        "arrays": (wf.astype(COMPUTE_DTYPE), w_slab, b_slab, lw.astype(COMPUTE_DTYPE), lb),
        "proj_flags": tuple(proj_flags),
        "input_dim": int(din),
        "dict_dim": int(dict_dim),
    }


# ------------------------------ fused forward ------------------------------- #

def make_forward_fn(packed):
    proj_flags = packed["proj_flags"]
    din = packed["input_dim"]
    dict_dim = packed["dict_dim"]
    dict_pad = _round_up(dict_dim, LANE)
    kernel = _make_fused_kernel(proj_flags)

    @jax.jit
    def forward(x, arrays):
        B = x.shape[0]
        tb = _batch_tile(B)
        b_pad = _round_up(B, tb)

        # bf16 input stream with its REAL feature dim; only the batch is padded.
        x_p = x.astype(COMPUTE_DTYPE)
        if b_pad != B:
            x_p = jnp.pad(x_p, ((0, b_pad - B), (0, 0)))

        n_blocks = len(proj_flags)
        first_cols = [2 * LANE if p else LANE for p in proj_flags]
        flops = 2 * b_pad * (din * first_cols[0]
                             + sum(LANE * c for c in first_cols[1:])
                             + n_blocks * LANE * LANE
                             + LANE * dict_pad)
        weight_bytes = sum(int(a.size) * a.dtype.itemsize for a in arrays)
        out_itemsize = jnp.finfo(OUT_DTYPE).bits // 8
        bytes_accessed = (int(x_p.size) * 2 + b_pad * dict_pad * out_itemsize
                          + weight_bytes)

        def const_spec(a):
            return pl.BlockSpec(a.shape, lambda i: (0, 0))   # fully VMEM-resident weights

        out = pl.pallas_call(
            kernel,
            out_shape=jax.ShapeDtypeStruct((b_pad, dict_pad), OUT_DTYPE),
            grid=(b_pad // tb,),
            in_specs=[pl.BlockSpec((tb, din), lambda i: (i, 0))]
                     + [const_spec(a) for a in arrays],
            out_specs=pl.BlockSpec((tb, dict_pad), lambda i: (i, 0)),
            compiler_params=pltpu.CompilerParams(
                dimension_semantics=("parallel",)),
            cost_estimate=pl.CostEstimate(
                flops=flops, transcendentals=0, bytes_accessed=bytes_accessed),
        )(x_p, *arrays)
        return out[:B, :dict_dim]

    return forward


# --------------------------- pure-JAX reference ------------------------------ #

def resnet_reference(x, raw):
    h = x
    for blk in raw["blocks"]:
        a = jax.nn.relu(h @ blk["w1"].T + blk["b1"])
        out = a @ blk["w2"].T + blk["b2"]
        sc = h if blk["ws"] is None else h @ blk["ws"].T + blk["bs"]
        h = jax.nn.relu(out + sc)
    return h @ raw["linear_w"].T + raw["linear_b"]


# ---------------------------------- main ------------------------------------ #

if __name__ == "__main__":
    key = jax.random.PRNGKey(0)
    k_params, k_x = jax.random.split(key)

    batch, input_dim = 8, 8
    num_blocks = (1, 1, 1)          # one residual block per stage (small config)
    dictionary_dim = 128

    raw = make_resnet_params(k_params, num_blocks, input_dim, dictionary_dim)
    packed = prepack_params(raw)
    forward = make_forward_fn(packed)

    x = jax.random.normal(k_x, (batch, input_dim), jnp.float32)
    y = forward(x, packed["arrays"])
    jax.block_until_ready(y)
    assert y.shape == (batch, dictionary_dim)

    # Loose tolerance: bf16 MXU operands; f32 accumulation, bias, ReLU, residual.
    y_ref = resnet_reference(x, raw)
    max_err = float(jnp.max(jnp.abs(y - y_ref)))
    assert jnp.allclose(y, y_ref, atol=5e-2, rtol=5e-2), max_err

    print("KERNEL_OK")
</pallas_src>

<mosaic_0001>
module attributes {stable_mosaic.version = 11 : i64} {
  func.func @kernel(%arg0: i32, %arg1: memref<8x8xbf16, #tpu.memory_space<vmem>>, %arg2: memref<8x256xbf16, #tpu.memory_space<vmem>>, %arg3: memref<640x256xbf16, #tpu.memory_space<vmem>>, %arg4: memref<6x128xf32, #tpu.memory_space<vmem>>, %arg5: memref<128x128xbf16, #tpu.memory_space<vmem>>, %arg6: memref<1x128xf32, #tpu.memory_space<vmem>>, %arg7: memref<8x128xf32, #tpu.memory_space<vmem>>) attributes {dimension_semantics = [#tpu.dimension_semantics<parallel>], iteration_bounds = array<i64: 1>, scalar_prefetch = 0 : i64, scratch_operands = 0 : i64, tpu.core_type = #tpu.core_type<tc>, window_params = [{transform_indices = @transform_0, window_bounds = array<i64: 8, 8>}, {pipeline_mode = #tpu.pipeline_mode<synchronous>, transform_indices = @transform_1, window_bounds = array<i64: 8, 256>}, {pipeline_mode = #tpu.pipeline_mode<synchronous>, transform_indices = @transform_2, window_bounds = array<i64: 640, 256>}, {pipeline_mode = #tpu.pipeline_mode<synchronous>, transform_indices = @transform_3, window_bounds = array<i64: 6, 128>}, {pipeline_mode = #tpu.pipeline_mode<synchronous>, transform_indices = @transform_4, window_bounds = array<i64: 128, 128>}, {pipeline_mode = #tpu.pipeline_mode<synchronous>, transform_indices = @transform_5, window_bounds = array<i64: 1, 128>}, {transform_indices = @transform_6, window_bounds = array<i64: 8, 128>}]} {
    %c0 = arith.constant 0 : index
    %c0_0 = arith.constant 0 : index
    %0 = vector.load %arg1[%c0, %c0_0] : memref<8x8xbf16, #tpu.memory_space<vmem>>, vector<8x8xbf16>
    %c0_1 = arith.constant 0 : index
    %c0_2 = arith.constant 0 : index
    %1 = vector.load %arg2[%c0_1, %c0_2] : memref<8x256xbf16, #tpu.memory_space<vmem>>, vector<8x256xbf16>
    %cst = arith.constant dense<0.000000e+00> : vector<8x256xf32>
    %2 = tpu.matmul %0, %1, %cst {dimension_numbers = #tpu.dot_dimension_numbers<[1], [0], [0], [1], [0, 0, 1, 1], [], []>} : vector<8x8xbf16>, vector<8x256xbf16>, vector<8x256xf32> -> vector<8x256xf32>
    %3 = vector.extract_strided_slice %2 {offsets = [0, 0], sizes = [8, 128], strides = [1, 1]} : vector<8x256xf32> to vector<8x128xf32>
    %c0_3 = arith.constant 0 : index
    %c0_4 = arith.constant 0 : index
    %4 = vector.load %arg4[%c0_3, %c0_4] : memref<6x128xf32, #tpu.memory_space<vmem>>, vector<1x128xf32>
    %5 = vector.broadcast %4 : vector<1x128xf32> to vector<8x128xf32>
    %6 = arith.addf %3, %5 : vector<8x128xf32>
    %cst_5 = arith.constant 0.000000e+00 : f32
    %7 = vector.broadcast %cst_5 : f32 to vector<8x128xf32>
    %8 = arith.maximumf %6, %7 : vector<8x128xf32>
    %9 = arith.truncf %8 : vector<8x128xf32> to vector<8x128xbf16>
    %c0_6 = arith.constant 0 : index
    %c0_7 = arith.constant 0 : index
    %10 = vector.load %arg3[%c0_6, %c0_7] : memref<640x256xbf16, #tpu.memory_space<vmem>>, vector<128x128xbf16>
    %cst_8 = arith.constant dense<0.000000e+00> : vector<8x128xf32>
    %11 = tpu.matmul %9, %10, %cst_8 {dimension_numbers = #tpu.dot_dimension_numbers<[1], [0], [0], [1], [0, 0, 1, 1], [], []>} : vector<8x128xbf16>, vector<128x128xbf16>, vector<8x128xf32> -> vector<8x128xf32>
    %c1 = arith.constant 1 : index
    %c0_9 = arith.constant 0 : index
    %12 = vector.load %arg4[%c1, %c0_9] : memref<6x128xf32, #tpu.memory_space<vmem>>, vector<1x128xf32>
    %13 = vector.broadcast %12 : vector<1x128xf32> to vector<8x128xf32>
    %14 = arith.addf %11, %13 : vector<8x128xf32>
    %15 = vector.extract_strided_slice %2 {offsets = [0, 128], sizes = [8, 128], strides = [1, 1]} : vector<8x256xf32> to vector<8x128xf32>
    %16 = arith.addf %14, %15 : vector<8x128xf32>
    %cst_10 = arith.constant 0.000000e+00 : f32
    %17 = vector.broadcast %cst_10 : f32 to vector<8x128xf32>
    %18 = arith.maximumf %16, %17 : vector<8x128xf32>
    %19 = arith.truncf %18 : vector<8x128xf32> to vector<8x128xbf16>
    %c128 = arith.constant 128 : index
    %c0_11 = arith.constant 0 : index
    %20 = vector.load %arg3[%c128, %c0_11] : memref<640x256xbf16, #tpu.memory_space<vmem>>, vector<128x256xbf16>
    %cst_12 = arith.constant dense<0.000000e+00> : vector<8x256xf32>
    %21 = tpu.matmul %19, %20, %cst_12 {dimension_numbers = #tpu.dot_dimension_numbers<[1], [0], [0], [1], [0, 0, 1, 1], [], []>} : vector<8x128xbf16>, vector<128x256xbf16>, vector<8x256xf32> -> vector<8x256xf32>
    %22 = vector.extract_strided_slice %21 {offsets = [0, 128], sizes = [8, 128], strides = [1, 1]} : vector<8x256xf32> to vector<8x128xf32>
    %23 = vector.extract_strided_slice %21 {offsets = [0, 0], sizes = [8, 128], strides = [1, 1]} : vector<8x256xf32> to vector<8x128xf32>
    %c2 = arith.constant 2 : index
    %c0_13 = arith.constant 0 : index
    %24 = vector.load %arg4[%c2, %c0_13] : memref<6x128xf32, #tpu.memory_space<vmem>>, vector<1x128xf32>
    %25 = vector.broadcast %24 : vector<1x128xf32> to vector<8x128xf32>
    %26 = arith.addf %23, %25 : vector<8x128xf32>
    %cst_14 = arith.constant 0.000000e+00 : f32
    %27 = vector.broadcast %cst_14 : f32 to vector<8x128xf32>
    %28 = arith.maximumf %26, %27 : vector<8x128xf32>
    %29 = arith.truncf %28 : vector<8x128xf32> to vector<8x128xbf16>
    %c256 = arith.constant 256 : index
    %c0_15 = arith.constant 0 : index
    %30 = vector.load %arg3[%c256, %c0_15] : memref<640x256xbf16, #tpu.memory_space<vmem>>, vector<128x128xbf16>
    %cst_16 = arith.constant dense<0.000000e+00> : vector<8x128xf32>
    %31 = tpu.matmul %29, %30, %cst_16 {dimension_numbers = #tpu.dot_dimension_numbers<[1], [0], [0], [1], [0, 0, 1, 1], [], []>} : vector<8x128xbf16>, vector<128x128xbf16>, vector<8x128xf32> -> vector<8x128xf32>
    %c3 = arith.constant 3 : index
    %c0_17 = arith.constant 0 : index
    %32 = vector.load %arg4[%c3, %c0_17] : memref<6x128xf32, #tpu.memory_space<vmem>>, vector<1x128xf32>
    %33 = vector.broadcast %32 : vector<1x128xf32> to vector<8x128xf32>
    %34 = arith.addf %31, %33 : vector<8x128xf32>
    %35 = arith.addf %34, %22 : vector<8x128xf32>
    %cst_18 = arith.constant 0.000000e+00 : f32
    %36 = vector.broadcast %cst_18 : f32 to vector<8x128xf32>
    %37 = arith.maximumf %35, %36 : vector<8x128xf32>
    %38 = arith.truncf %37 : vector<8x128xf32> to vector<8x128xbf16>
    %c384 = arith.constant 384 : index
    %c0_19 = arith.constant 0 : index
    %39 = vector.load %arg3[%c384, %c0_19] : memref<640x256xbf16, #tpu.memory_space<vmem>>, vector<128x256xbf16>
    %cst_20 = arith.constant dense<0.000000e+00> : vector<8x256xf32>
    %40 = tpu.matmul %38, %39, %cst_20 {dimension_numbers = #tpu.dot_dimension_numbers<[1], [0], [0], [1], [0, 0, 1, 1], [], []>} : vector<8x128xbf16>, vector<128x256xbf16>, vector<8x256xf32> -> vector<8x256xf32>
    %41 = vector.extract_strided_slice %40 {offsets = [0, 128], sizes = [8, 128], strides = [1, 1]} : vector<8x256xf32> to vector<8x128xf32>
    %42 = vector.extract_strided_slice %40 {offsets = [0, 0], sizes = [8, 128], strides = [1, 1]} : vector<8x256xf32> to vector<8x128xf32>
    %c4 = arith.constant 4 : index
    %c0_21 = arith.constant 0 : index
    %43 = vector.load %arg4[%c4, %c0_21] : memref<6x128xf32, #tpu.memory_space<vmem>>, vector<1x128xf32>
    %44 = vector.broadcast %43 : vector<1x128xf32> to vector<8x128xf32>
    %45 = arith.addf %42, %44 : vector<8x128xf32>
    %cst_22 = arith.constant 0.000000e+00 : f32
    %46 = vector.broadcast %cst_22 : f32 to vector<8x128xf32>
    %47 = arith.maximumf %45, %46 : vector<8x128xf32>
    %48 = arith.truncf %47 : vector<8x128xf32> to vector<8x128xbf16>
    %c512 = arith.constant 512 : index
    %c0_23 = arith.constant 0 : index
    %49 = vector.load %arg3[%c512, %c0_23] : memref<640x256xbf16, #tpu.memory_space<vmem>>, vector<128x128xbf16>
    %cst_24 = arith.constant dense<0.000000e+00> : vector<8x128xf32>
    %50 = tpu.matmul %48, %49, %cst_24 {dimension_numbers = #tpu.dot_dimension_numbers<[1], [0], [0], [1], [0, 0, 1, 1], [], []>} : vector<8x128xbf16>, vector<128x128xbf16>, vector<8x128xf32> -> vector<8x128xf32>
    %c5 = arith.constant 5 : index
    %c0_25 = arith.constant 0 : index
    %51 = vector.load %arg4[%c5, %c0_25] : memref<6x128xf32, #tpu.memory_space<vmem>>, vector<1x128xf32>
    %52 = vector.broadcast %51 : vector<1x128xf32> to vector<8x128xf32>
    %53 = arith.addf %50, %52 : vector<8x128xf32>
    %54 = arith.addf %53, %41 : vector<8x128xf32>
    %cst_26 = arith.constant 0.000000e+00 : f32
    %55 = vector.broadcast %cst_26 : f32 to vector<8x128xf32>
    %56 = arith.maximumf %54, %55 : vector<8x128xf32>
    %57 = arith.truncf %56 : vector<8x128xf32> to vector<8x128xbf16>
    %c0_27 = arith.constant 0 : index
    %c0_28 = arith.constant 0 : index
    %58 = vector.load %arg5[%c0_27, %c0_28] : memref<128x128xbf16, #tpu.memory_space<vmem>>, vector<128x128xbf16>
    %cst_29 = arith.constant dense<0.000000e+00> : vector<8x128xf32>
    %59 = tpu.matmul %57, %58, %cst_29 {dimension_numbers = #tpu.dot_dimension_numbers<[1], [0], [0], [1], [0, 0, 1, 1], [], []>} : vector<8x128xbf16>, vector<128x128xbf16>, vector<8x128xf32> -> vector<8x128xf32>
    %c0_30 = arith.constant 0 : index
    %c0_31 = arith.constant 0 : index
    %60 = vector.load %arg6[%c0_30, %c0_31] : memref<1x128xf32, #tpu.memory_space<vmem>>, vector<1x128xf32>
    %61 = vector.broadcast %60 : vector<1x128xf32> to vector<8x128xf32>
    %62 = arith.addf %59, %61 : vector<8x128xf32>
    %c0_32 = arith.constant 0 : index
    %c0_33 = arith.constant 0 : index
    %63 = vector.load %arg7[%c0_32, %c0_33] : memref<8x128xf32, #tpu.memory_space<vmem>>, vector<8x128xf32>
    tpu.vector_store %arg7[%c0_32, %c0_33], %62 {strides = array<i32>} : memref<8x128xf32, #tpu.memory_space<vmem>>, vector<8x128xf32>,
    return
  }
  func.func @transform_0(%arg0: i32) -> (i32, i32) {
    %c0_i32 = arith.constant 0 : i32
    %c0_i32_0 = arith.constant 0 : i32
    return %arg0, %c0_i32 : i32, i32
  }
  func.func @transform_1(%arg0: i32) -> (i32, i32) {
    %c0_i32 = arith.constant 0 : i32
    %c0_i32_0 = arith.constant 0 : i32
    %c0_i32_1 = arith.constant 0 : i32
    return %c0_i32, %c0_i32_0 : i32, i32
  }
  func.func @transform_2(%arg0: i32) -> (i32, i32) {
    %c0_i32 = arith.constant 0 : i32
    %c0_i32_0 = arith.constant 0 : i32
    %c0_i32_1 = arith.constant 0 : i32
    return %c0_i32, %c0_i32_0 : i32, i32
  }
  func.func @transform_3(%arg0: i32) -> (i32, i32) {
    %c0_i32 = arith.constant 0 : i32
    %c0_i32_0 = arith.constant 0 : i32
    %c0_i32_1 = arith.constant 0 : i32
    return %c0_i32, %c0_i32_0 : i32, i32
  }
  func.func @transform_4(%arg0: i32) -> (i32, i32) {
    %c0_i32 = arith.constant 0 : i32
    %c0_i32_0 = arith.constant 0 : i32
    %c0_i32_1 = arith.constant 0 : i32
    return %c0_i32, %c0_i32_0 : i32, i32
  }
  func.func @transform_5(%arg0: i32) -> (i32, i32) {
    %c0_i32 = arith.constant 0 : i32
    %c0_i32_0 = arith.constant 0 : i32
    %c0_i32_1 = arith.constant 0 : i32
    return %c0_i32, %c0_i32_0 : i32, i32
  }
  func.func @transform_6(%arg0: i32) -> (i32, i32) {
    %c0_i32 = arith.constant 0 : i32
    %c0_i32_0 = arith.constant 0 : i32
    return %arg0, %c0_i32 : i32, i32
  }
}

</mosaic_0001>

<llo_original>
// kernel: forward.1
$region0: #{forward.1}
  #allocation0 [shape = 'u32[]', space=smem, size = 0x4, offset = 0x4, fixed_abs, tag = 'smem constant byte address 0x4 - core index']
  #allocation1 [shape = 'u32[144,128]{1,0:T(1,128)}', space=vmem, size = 0x12000, scoped, tag = 'internal scratch']
  %s0 = inlined_call_operand.vmem [shape: bf16[8,8], index: 0, kind: input, shape index: {}]
  %s1 = inlined_call_operand.vmem [shape: bf16[8,256], index: 1, kind: input, shape index: {}]
  %s2 = inlined_call_operand.hbm [shape: bf16[640,256], index: 2, kind: input, shape index: {}]
  %s3 = inlined_call_operand.vmem [shape: f32[6,128], index: 3, kind: input, shape index: {}]
  %s4 = inlined_call_operand.hbm [shape: bf16[128,128], index: 4, kind: input, shape index: {}]
  %s5 = inlined_call_operand.vmem [shape: f32[1,128], index: 5, kind: input, shape index: {}]
  %s6 = inlined_call_operand.hbm [shape: f32[8,128], index: 6, kind: output, shape index: {}]
  %s7 = sld [smem:[#allocation0]]
  $region42: #{forward.1} parent=0
    _
  %s9 = ssub.s32 1, %s7
  %s10 = scalar_select 0, %s9, %s7
  $region1: #{forward.1} parent=0
    #allocation2 [shape = 'u8[327680]{0}', space=vmem, size = 0x50000, scoped, tag = 'input window, operand 2, single buffered']
    #allocation3 [shape = 's32[1]{0}', space=sflag, size = 0x4, scoped, tag = 'scoped memory for forward.1']
    #allocation4 [shape = 's32[1]{0}', space=sflag, size = 0x4, scoped, tag = 'scoped memory for forward.1']
    #allocation5 [shape = 'u8[32768]{0}', space=vmem, size = 0x8000, scoped, tag = 'input window, operand 4, single buffered']
    #allocation6 [shape = 's32[1]{0}', space=sflag, size = 0x4, scoped, tag = 'scoped memory for forward.1']
    #allocation7 [shape = 'u8[4096]{0}', space=vmem, size = 0x1000, scoped, tag = 'output window, operand 0, single buffered']
    %11 = vsyncpa [#allocation3], 0
    %12 = vsyncpa [#allocation6], 0
    %13 = vsyncpa [#allocation4], 0
    // Predicated region
    $region2: #{forward.1} parent=1 // pred_check
      _
    $region3: #{forward.1} parent=1 // pred_check_branch
      %15 = sbr.rel (0) target = $region5
    $region4: #{forward.1} parent=1 // pred_region
      _
    $region5: #{forward.1} parent=1 // pred_fallthru
      _
    // Predicated region
    $region6: #{forward.1} parent=1 // pred_check
      _
    $region7: #{forward.1} parent=1 // pred_check_branch
      %17 = sbr.rel (0) target = $region9
    $region8: #{forward.1} parent=1 // pred_region
      _
    $region9: #{forward.1} parent=1 // pred_fallthru
      _
    // Predicated region
    $region10: #{forward.1} parent=1 // pred_check
      _
    $region11: #{forward.1} parent=1 // pred_check_branch
      %19 = sbr.rel (0) target = $region13
    $region12: #{forward.1} parent=1 // pred_region
      %s21 = ssub.s32 10240, 10240
      %22 = vsyncadd [#allocation3], %s21
      %s23 = sshll.u32 [#allocation2], 4
      %s24 = int_to_ptr.vmem [resolvable:$true] %s23
      %29 = dma.hbm_to_vmem [thread:$0]  %s2, 10240, %s24, [#allocation3], 128, 128, 8
    $region13: #{forward.1} parent=1 // pred_fallthru
      _
    // Predicated region
    $region14: #{forward.1} parent=1 // pred_check
      _
    $region15: #{forward.1} parent=1 // pred_check_branch
      %31 = sbr.rel (0) target = $region17
    $region16: #{forward.1} parent=1 // pred_region
      _
    $region17: #{forward.1} parent=1 // pred_fallthru
      _
    // Predicated region
    $region18: #{forward.1} parent=1 // pred_check
      _
    $region19: #{forward.1} parent=1 // pred_check_branch
      %33 = sbr.rel (0) target = $region21
    $region20: #{forward.1} parent=1 // pred_region
      %s35 = ssub.s32 1024, 1024
      %36 = vsyncadd [#allocation6], %s35
      %s37 = sshll.u32 [#allocation5], 4
      %s38 = int_to_ptr.vmem [resolvable:$true] %s37
      %43 = dma.hbm_to_vmem [thread:$0]  %s4, 1024, %s38, [#allocation6], 64, 64, 4
    $region21: #{forward.1} parent=1 // pred_fallthru
      _
    // Predicated region
    $region22: #{forward.1} parent=1 // pred_check
      _
    $region23: #{forward.1} parent=1 // pred_check_branch
      %45 = sbr.rel (0) target = $region25
    $region24: #{forward.1} parent=1 // pred_region
      _
    $region25: #{forward.1} parent=1 // pred_fallthru
      _
    // Predicated region
    $region26: #{forward.1} parent=1 // pred_check
      _
    $region27: #{forward.1} parent=1 // pred_check_branch
      %47 = sbr.rel (0) target = $region29
    $region28: #{forward.1} parent=1 // pred_region
      %48 = dma.done [#allocation3], 10240
    $region29: #{forward.1} parent=1 // pred_fallthru
      _
    // Predicated region
    $region30: #{forward.1} parent=1 // pred_check
      _
    $region31: #{forward.1} parent=1 // pred_check_branch
      %50 = sbr.rel (0) target = $region33
    $region32: #{forward.1} parent=1 // pred_region
      %51 = dma.done [#allocation6], 1024
    $region33: #{forward.1} parent=1 // pred_fallthru
      _
    %v53 = vld [vmem:[%s0] sm:$0xf]
    %v54 = vld [vmem:[%s1] sm:$0xff]
    %v56 = vunpack.c.l.b16 %v54
    %v57 = vunpack.c.h.b16 %v54
    %v58 = vpack.c.b16 %v56, %v56
    %v59 = vpack.c.b16 %v57, %v57
    %vm60 = vcmask 64512
    %v62 = vsel %vm60, %v53, 0
    %vm64 = vcmask 1043456
    %v66 = vsel %vm64, %v58, 0
    %v69 = vsel %vm64, %v59, 0
    %71 = vmatprep.subr.bf16.mxu0 0
    %72 = vmatpush1.bf16.msra.mxu0 0
    %73 = vmatprep.subr.bf16.mxu0 0
    %74 = vmatpush1.bf16.msra.mxu0 0
    %75 = vmatprep.subr.bf16.mxu0 0
    %76 = vmatpush1.bf16.msra.mxu0 0
    %77 = vmatprep.subr.bf16.mxu0 0
    %78 = vmatpush1.bf16.msra.mxu0 0
    %79 = vmatprep.subr.bf16.mxu0 0
    %80 = vmatpush1.bf16.msra.mxu0 0
    %81 = vmatprep.subr.bf16.mxu0 0
    %82 = vmatpush1.bf16.msra.mxu0 0
    %83 = vmatprep.subr.bf16.mxu0 0
    %84 = vmatpush1.bf16.msra.mxu0 0
    %85 = vmatprep.subr.bf16.mxu0 %v69
    %86 = vmatpush1.bf16.msra.mxu0 %v66
    %87 = vmatprep.subr.bf16.mxu0 0
    %88 = vmatpush2.bf16.msra.mxu0 0
    %89 = vmatprep.subr.bf16.mxu0 0
    %90 = vmatpush2.bf16.msra.mxu0 0
    %91 = vmatprep.subr.bf16.mxu0 0
    %92 = vmatpush2.bf16.msra.mxu0 0
    %93 = vmatprep.subr.bf16.mxu0 0
    %94 = vmatpush2.bf16.msra.mxu0 0
    %95 = vmatprep.subr.bf16.mxu0 0
    %96 = vmatpush2.bf16.msra.mxu0 0
    %97 = vmatprep.subr.bf16.mxu0 0
    %98 = vmatpush2.bf16.msra.mxu0 0
    %99 = vmatprep.subr.bf16.mxu0 0
    %100 = vmatpush2.bf16.msra.mxu0 0
    %101 = vmatprep.subr.bf16.mxu0 0
    %102 = vmatpush2.bf16.msra.mxu0 0
    %103 = vmatprep.mubr.bf16.mxu0 0
    %104 = vmatmul.mubr.bf16.gmra.mxu0 %v62
    %v105 = vpop.f32.mrf.mxu0
    %v106 = vadd.f32 0.0, %v105
    %v107 = vpop.f32.mrf.mxu0
    %v108 = vadd.f32 0.0, %v107
    %v109 = vpop.f32.mrf.mxu0
    %v110 = vpop.f32.mrf.mxu0
    %111 = vdwg.mxu0
    %v112 = vld [vmem:[%s3] sm:$0x1]
    %v113 = vlaneseq
    %v114 = vshrl.u32 %v113, 7
    %v115 = vsub.s32 0, %v114
    %v116 = vrot.slane %v112, %v115
    %v117 = vadd.f32 %v106, %v116
    %v118 = vmax.f32 %v117, 0.0
    %v119 = vpack.c.bf16 %v118, %v118
    %v120 = vld [vmem:[#allocation2] sm:$0xf]
    %v121 = vld [vmem:[#allocation2 + $0x8] sm:$0xf]
    %v122 = vld [vmem:[#allocation2 + $0x10] sm:$0xf]
    %v123 = vld [vmem:[#allocation2 + $0x18] sm:$0xf]
    %v124 = vld [vmem:[#allocation2 + $0x20] sm:$0xf]
    %v125 = vld [vmem:[#allocation2 + $0x28] sm:$0xf]
    %v126 = vld [vmem:[#allocation2 + $0x30] sm:$0xf]
    %v127 = vld [vmem:[#allocation2 + $0x38] sm:$0xf]
    %v128 = vld [vmem:[#allocation2 + $0x40] sm:$0xf]
    %v129 = vld [vmem:[#allocation2 + $0x48] sm:$0xf]
    %v130 = vld [vmem:[#allocation2 + $0x50] sm:$0xf]
    %v131 = vld [vmem:[#allocation2 + $0x58] sm:$0xf]
    %v132 = vld [vmem:[#allocation2 + $0x60] sm:$0xf]
    %v133 = vld [vmem:[#allocation2 + $0x68] sm:$0xf]
    %v134 = vld [vmem:[#allocation2 + $0x70] sm:$0xf]
    %v135 = vld [vmem:[#allocation2 + $0x78] sm:$0xf]
    %v136 = vld [vmem:[%s3 + $0x1] sm:$0x1]
    %v137 = vlaneseq
    %v138 = vshrl.u32 %v137, 7
    %v139 = vsub.s32 0, %v138
    %v140 = vrot.slane %v136, %v139
    %v157 = vunpack.c.l.b16 %v120
    %v158 = vunpack.c.l.b16 %v121
    %v159 = vunpack.c.l.b16 %v122
    %v160 = vunpack.c.l.b16 %v123
    %v161 = vunpack.c.l.b16 %v124
    %v162 = vunpack.c.l.b16 %v125
    %v163 = vunpack.c.l.b16 %v126
    %v164 = vunpack.c.l.b16 %v127
    %v165 = vunpack.c.l.b16 %v128
    %v166 = vunpack.c.l.b16 %v129
    %v167 = vunpack.c.l.b16 %v130
    %v168 = vunpack.c.l.b16 %v131
    %v169 = vunpack.c.l.b16 %v132
    %v170 = vunpack.c.l.b16 %v133
    %v171 = vunpack.c.l.b16 %v134
    %v172 = vunpack.c.l.b16 %v135
    %v173 = vpack.c.b16 %v158, %v157
    %v174 = vpack.c.b16 %v160, %v159
    %v175 = vpack.c.b16 %v162, %v161
    %v176 = vpack.c.b16 %v164, %v163
    %v177 = vpack.c.b16 %v166, %v165
    %v178 = vpack.c.b16 %v168, %v167
    %v179 = vpack.c.b16 %v170, %v169
    %v180 = vpack.c.b16 %v172, %v171
    %189 = vmatprep.subr.bf16.mxu0 0
    %190 = vmatpush1.bf16.msra.mxu0 %v180
    %191 = vmatprep.subr.bf16.mxu0 0
    %192 = vmatpush1.bf16.msra.mxu0 %v179
    %193 = vmatprep.subr.bf16.mxu0 0
    %194 = vmatpush1.bf16.msra.mxu0 %v178
    %195 = vmatprep.subr.bf16.mxu0 0
    %196 = vmatpush1.bf16.msra.mxu0 %v177
    %197 = vmatprep.subr.bf16.mxu0 0
    %198 = vmatpush1.bf16.msra.mxu0 %v176
    %199 = vmatprep.subr.bf16.mxu0 0
    %200 = vmatpush1.bf16.msra.mxu0 %v175
    %201 = vmatprep.subr.bf16.mxu0 0
    %202 = vmatpush1.bf16.msra.mxu0 %v174
    %203 = vmatprep.subr.bf16.mxu0 0
    %204 = vmatpush1.bf16.msra.mxu0 %v173
    %205 = vmatprep.subr.bf16.mxu0 0
    %206 = vmatpush2.bf16.msra.mxu0 0
    %207 = vmatprep.subr.bf16.mxu0 0
    %208 = vmatpush2.bf16.msra.mxu0 0
    %209 = vmatprep.subr.bf16.mxu0 0
    %210 = vmatpush2.bf16.msra.mxu0 0
    %211 = vmatprep.subr.bf16.mxu0 0
    %212 = vmatpush2.bf16.msra.mxu0 0
    %213 = vmatprep.subr.bf16.mxu0 0
    %214 = vmatpush2.bf16.msra.mxu0 0
    %215 = vmatprep.subr.bf16.mxu0 0
    %216 = vmatpush2.bf16.msra.mxu0 0
    %217 = vmatprep.subr.bf16.mxu0 0
    %218 = vmatpush2.bf16.msra.mxu0 0
    %219 = vmatprep.subr.bf16.mxu0 0
    %220 = vmatpush2.bf16.msra.mxu0 0
    %221 = vmatprep.mubr.bf16.mxu0 0
    %222 = vmatmul.mubr.bf16.gmra.mxu0 %v119
    %v223 = vpop.f32.mrf.mxu0
    %v224 = vadd.f32 %v140, %v223
    %v225 = vpop.f32.mrf.mxu0
    %v226 = vpop.f32.mrf.mxu0
    %v227 = vpop.f32.mrf.mxu0
    %228 = vdwg.mxu0
    %v229 = vadd.f32 %v224, %v108
    %v230 = vmax.f32 %v229, 0.0
    %v231 = vpack.c.bf16 %v230, %v230
    %v232 = vld [vmem:[#allocation2 + $0x80] sm:$0xff]
    %v233 = vld [vmem:[#allocation2 + $0x88] sm:$0xff]
    %v234 = vld [vmem:[#allocation2 + $0x90] sm:$0xff]
    %v235 = vld [vmem:[#allocation2 + $0x98] sm:$0xff]
    %v236 = vld [vmem:[#allocation2 + $0xa0] sm:$0xff]
    %v237 = vld [vmem:[#allocation2 + $0xa8] sm:$0xff]
    %v238 = vld [vmem:[#allocation2 + $0xb0] sm:$0xff]
    %v239 = vld [vmem:[#allocation2 + $0xb8] sm:$0xff]
    %v240 = vld [vmem:[#allocation2 + $0xc0] sm:$0xff]
    %v241 = vld [vmem:[#allocation2 + $0xc8] sm:$0xff]
    %v242 = vld [vmem:[#allocation2 + $0xd0] sm:$0xff]
    %v243 = vld [vmem:[#allocation2 + $0xd8] sm:$0xff]
    %v244 = vld [vmem:[#allocation2 + $0xe0] sm:$0xff]
    %v245 = vld [vmem:[#allocation2 + $0xe8] sm:$0xff]
    %v246 = vld [vmem:[#allocation2 + $0xf0] sm:$0xff]
    %v247 = vld [vmem:[#allocation2 + $0xf8] sm:$0xff]
    %v264 = vunpack.c.l.b16 %v232
    %v265 = vunpack.c.h.b16 %v232
    %v266 = vunpack.c.l.b16 %v233
    %v267 = vunpack.c.h.b16 %v233
    %v268 = vunpack.c.l.b16 %v234
    %v269 = vunpack.c.h.b16 %v234
    %v270 = vunpack.c.l.b16 %v235
    %v271 = vunpack.c.h.b16 %v235
    %v272 = vunpack.c.l.b16 %v236
    %v273 = vunpack.c.h.b16 %v236
    %v274 = vunpack.c.l.b16 %v237
    %v275 = vunpack.c.h.b16 %v237
    %v276 = vunpack.c.l.b16 %v238
    %v277 = vunpack.c.h.b16 %v238
    %v278 = vunpack.c.l.b16 %v239
    %v279 = vunpack.c.h.b16 %v239
    %v280 = vunpack.c.l.b16 %v240
    %v281 = vunpack.c.h.b16 %v240
    %v282 = vunpack.c.l.b16 %v241
    %v283 = vunpack.c.h.b16 %v241
    %v284 = vunpack.c.l.b16 %v242
    %v285 = vunpack.c.h.b16 %v242
    %v286 = vunpack.c.l.b16 %v243
    %v287 = vunpack.c.h.b16 %v243
    %v288 = vunpack.c.l.b16 %v244
    %v289 = vunpack.c.h.b16 %v244
    %v290 = vunpack.c.l.b16 %v245
    %v291 = vunpack.c.h.b16 %v245
    %v292 = vunpack.c.l.b16 %v246
    %v293 = vunpack.c.h.b16 %v246
    %v294 = vunpack.c.l.b16 %v247
    %v295 = vunpack.c.h.b16 %v247
    %v296 = vpack.c.b16 %v266, %v264
    %v297 = vpack.c.b16 %v267, %v265
    %v298 = vpack.c.b16 %v270, %v268
    %v299 = vpack.c.b16 %v271, %v269
    %v300 = vpack.c.b16 %v274, %v272
    %v301 = vpack.c.b16 %v275, %v273
    %v302 = vpack.c.b16 %v278, %v276
    %v303 = vpack.c.b16 %v279, %v277
    %v304 = vpack.c.b16 %v282, %v280
    %v305 = vpack.c.b16 %v283, %v281
    %v306 = vpack.c.b16 %v286, %v284
    %v307 = vpack.c.b16 %v287, %v285
    %v308 = vpack.c.b16 %v290, %v288
    %v309 = vpack.c.b16 %v291, %v289
    %v310 = vpack.c.b16 %v294, %v292
    %v311 = vpack.c.b16 %v295, %v293
    %328 = vmatprep.subr.bf16.mxu0 %v311
    %329 = vmatpush1.bf16.msra.mxu0 %v310
    %330 = vmatprep.subr.bf16.mxu0 %v309
    %331 = vmatpush1.bf16.msra.mxu0 %v308
    %332 = vmatprep.subr.bf16.mxu0 %v307
    %333 = vmatpush1.bf16.msra.mxu0 %v306
    %334 = vmatprep.subr.bf16.mxu0 %v305
    %335 = vmatpush1.bf16.msra.mxu0 %v304
    %336 = vmatprep.subr.bf16.mxu0 %v303
    %337 = vmatpush1.bf16.msra.mxu0 %v302
    %338 = vmatprep.subr.bf16.mxu0 %v301
    %339 = vmatpush1.bf16.msra.mxu0 %v300
    %340 = vmatprep.subr.bf16.mxu0 %v299
    %341 = vmatpush1.bf16.msra.mxu0 %v298
    %342 = vmatprep.subr.bf16.mxu0 %v297
    %343 = vmatpush1.bf16.msra.mxu0 %v296
    %344 = vmatprep.subr.bf16.mxu0 0
    %345 = vmatpush2.bf16.msra.mxu0 0
    %346 = vmatprep.subr.bf16.mxu0 0
    %347 = vmatpush2.bf16.msra.mxu0 0
    %348 = vmatprep.subr.bf16.mxu0 0
    %349 = vmatpush2.bf16.msra.mxu0 0
    %350 = vmatprep.subr.bf16.mxu0 0
    %351 = vmatpush2.bf16.msra.mxu0 0
    %352 = vmatprep.subr.bf16.mxu0 0
    %353 = vmatpush2.bf16.msra.mxu0 0
    %354 = vmatprep.subr.bf16.mxu0 0
    %355 = vmatpush2.bf16.msra.mxu0 0
    %356 = vmatprep.subr.bf16.mxu0 0
    %357 = vmatpush2.bf16.msra.mxu0 0
    %358 = vmatprep.subr.bf16.mxu0 0
    %359 = vmatpush2.bf16.msra.mxu0 0
    %360 = vmatprep.mubr.bf16.mxu0 0
    %361 = vmatmul.mubr.bf16.gmra.mxu0 %v231
    %v362 = vpop.f32.mrf.mxu0
    %v363 = vadd.f32 0.0, %v362
    %v364 = vpop.f32.mrf.mxu0
    %v365 = vadd.f32 0.0, %v364
    %v366 = vpop.f32.mrf.mxu0
    %v367 = vpop.f32.mrf.mxu0
    %368 = vdwg.mxu0
    %v369 = vld [vmem:[%s3 + $0x2] sm:$0x1]
    %v370 = vlaneseq
    %v371 = vshrl.u32 %v370, 7
    %v372 = vsub.s32 0, %v371
    %v373 = vrot.slane %v369, %v372
    %v374 = vadd.f32 %v363, %v373
    %v375 = vmax.f32 %v374, 0.0
    %v376 = vpack.c.bf16 %v375, %v375
    %v377 = vld [vmem:[#allocation2 + $0x100] sm:$0xf]
    %v378 = vld [vmem:[#allocation2 + $0x108] sm:$0xf]
    %v379 = vld [vmem:[#allocation2 + $0x110] sm:$0xf]
    %v380 = vld [vmem:[#allocation2 + $0x118] sm:$0xf]
    %v381 = vld [vmem:[#allocation2 + $0x120] sm:$0xf]
    %v382 = vld [vmem:[#allocation2 + $0x128] sm:$0xf]
    %v383 = vld [vmem:[#allocation2 + $0x130] sm:$0xf]
    %v384 = vld [vmem:[#allocation2 + $0x138] sm:$0xf]
    %v385 = vld [vmem:[#allocation2 + $0x140] sm:$0xf]
    %v386 = vld [vmem:[#allocation2 + $0x148] sm:$0xf]
    %v387 = vld [vmem:[#allocation2 + $0x150] sm:$0xf]
    %v388 = vld [vmem:[#allocation2 + $0x158] sm:$0xf]
    %v389 = vld [vmem:[#allocation2 + $0x160] sm:$0xf]
    %v390 = vld [vmem:[#allocation2 + $0x168] sm:$0xf]
    %v391 = vld [vmem:[#allocation2 + $0x170] sm:$0xf]
    %v392 = vld [vmem:[#allocation2 + $0x178] sm:$0xf]
    %v393 = vld [vmem:[%s3 + $0x3] sm:$0x1]
    %v394 = vlaneseq
    %v395 = vshrl.u32 %v394, 7
    %v396 = vsub.s32 0, %v395
    %v397 = vrot.slane %v393, %v396
    %v414 = vunpack.c.l.b16 %v377
    %v415 = vunpack.c.l.b16 %v378
    %v416 = vunpack.c.l.b16 %v379
    %v417 = vunpack.c.l.b16 %v380
    %v418 = vunpack.c.l.b16 %v381
    %v419 = vunpack.c.l.b16 %v382
    %v420 = vunpack.c.l.b16 %v383
    %v421 = vunpack.c.l.b16 %v384
    %v422 = vunpack.c.l.b16 %v385
    %v423 = vunpack.c.l.b16 %v386
    %v424 = vunpack.c.l.b16 %v387
    %v425 = vunpack.c.l.b16 %v388
    %v426 = vunpack.c.l.b16 %v389
    %v427 = vunpack.c.l.b16 %v390
    %v428 = vunpack.c.l.b16 %v391
    %v429 = vunpack.c.l.b16 %v392
    %v430 = vpack.c.b16 %v415, %v414
    %v431 = vpack.c.b16 %v417, %v416
    %v432 = vpack.c.b16 %v419, %v418
    %v433 = vpack.c.b16 %v421, %v420
    %v434 = vpack.c.b16 %v423, %v422
    %v435 = vpack.c.b16 %v425, %v424
    %v436 = vpack.c.b16 %v427, %v426
    %v437 = vpack.c.b16 %v429, %v428
    %446 = vmatprep.subr.bf16.mxu0 0
    %447 = vmatpush1.bf16.msra.mxu0 %v437
    %448 = vmatprep.subr.bf16.mxu0 0
    %449 = vmatpush1.bf16.msra.mxu0 %v436
    %450 = vmatprep.subr.bf16.mxu0 0
    %451 = vmatpush1.bf16.msra.mxu0 %v435
    %452 = vmatprep.subr.bf16.mxu0 0
    %453 = vmatpush1.bf16.msra.mxu0 %v434
    %454 = vmatprep.subr.bf16.mxu0 0
    %455 = vmatpush1.bf16.msra.mxu0 %v433
    %456 = vmatprep.subr.bf16.mxu0 0
    %457 = vmatpush1.bf16.msra.mxu0 %v432
    %458 = vmatprep.subr.bf16.mxu0 0
    %459 = vmatpush1.bf16.msra.mxu0 %v431
    %460 = vmatprep.subr.bf16.mxu0 0
    %461 = vmatpush1.bf16.msra.mxu0 %v430
    %462 = vmatprep.subr.bf16.mxu0 0
    %463 = vmatpush2.bf16.msra.mxu0 0
    %464 = vmatprep.subr.bf16.mxu0 0
    %465 = vmatpush2.bf16.msra.mxu0 0
    %466 = vmatprep.subr.bf16.mxu0 0
    %467 = vmatpush2.bf16.msra.mxu0 0
    %468 = vmatprep.subr.bf16.mxu0 0
    %469 = vmatpush2.bf16.msra.mxu0 0
    %470 = vmatprep.subr.bf16.mxu0 0
    %471 = vmatpush2.bf16.msra.mxu0 0
    %472 = vmatprep.subr.bf16.mxu0 0
    %473 = vmatpush2.bf16.msra.mxu0 0
    %474 = vmatprep.subr.bf16.mxu0 0
    %475 = vmatpush2.bf16.msra.mxu0 0
    %476 = vmatprep.subr.bf16.mxu0 0
    %477 = vmatpush2.bf16.msra.mxu0 0
    %478 = vmatprep.mubr.bf16.mxu0 0
    %479 = vmatmul.mubr.bf16.gmra.mxu0 %v376
    %v480 = vpop.f32.mrf.mxu0
    %v481 = vadd.f32 %v397, %v480
    %v482 = vpop.f32.mrf.mxu0
    %v483 = vpop.f32.mrf.mxu0
    %v484 = vpop.f32.mrf.mxu0
    %485 = vdwg.mxu0
    %v486 = vadd.f32 %v481, %v365
    %v487 = vmax.f32 %v486, 0.0
    %v488 = vpack.c.bf16 %v487, %v487
    %v489 = vld [vmem:[#allocation2 + $0x180] sm:$0xff]
    %v490 = vld [vmem:[#allocation2 + $0x188] sm:$0xff]
    %v491 = vld [vmem:[#allocation2 + $0x190] sm:$0xff]
    %v492 = vld [vmem:[#allocation2 + $0x198] sm:$0xff]
    %v493 = vld [vmem:[#allocation2 + $0x1a0] sm:$0xff]
    %v494 = vld [vmem:[#allocation2 + $0x1a8] sm:$0xff]
    %v495 = vld [vmem:[#allocation2 + $0x1b0] sm:$0xff]
    %v496 = vld [vmem:[#allocation2 + $0x1b8] sm:$0xff]
    %v497 = vld [vmem:[#allocation2 + $0x1c0] sm:$0xff]
    %v498 = vld [vmem:[#allocation2 + $0x1c8] sm:$0xff]
    %v499 = vld [vmem:[#allocation2 + $0x1d0] sm:$0xff]
    %v500 = vld [vmem:[#allocation2 + $0x1d8] sm:$0xff]
    %v501 = vld [vmem:[#allocation2 + $0x1e0] sm:$0xff]
    %v502 = vld [vmem:[#allocation2 + $0x1e8] sm:$0xff]
    %v503 = vld [vmem:[#allocation2 + $0x1f0] sm:$0xff]
    %v504 = vld [vmem:[#allocation2 + $0x1f8] sm:$0xff]
    %v521 = vunpack.c.l.b16 %v489
    %v522 = vunpack.c.h.b16 %v489
    %v523 = vunpack.c.l.b16 %v490
    %v524 = vunpack.c.h.b16 %v490
    %v525 = vunpack.c.l.b16 %v491
    %v526 = vunpack.c.h.b16 %v491
    %v527 = vunpack.c.l.b16 %v492
    %v528 = vunpack.c.h.b16 %v492
    %v529 = vunpack.c.l.b16 %v493
    %v530 = vunpack.c.h.b16 %v493
    %v531 = vunpack.c.l.b16 %v494
    %v532 = vunpack.c.h.b16 %v494
    %v533 = vunpack.c.l.b16 %v495
    %v534 = vunpack.c.h.b16 %v495
    %v535 = vunpack.c.l.b16 %v496
    %v536 = vunpack.c.h.b16 %v496
    %v537 = vunpack.c.l.b16 %v497
    %v538 = vunpack.c.h.b16 %v497
    %v539 = vunpack.c.l.b16 %v498
    %v540 = vunpack.c.h.b16 %v498
    %v541 = vunpack.c.l.b16 %v499
    %v542 = vunpack.c.h.b16 %v499
    %v543 = vunpack.c.l.b16 %v500
    %v544 = vunpack.c.h.b16 %v500
    %v545 = vunpack.c.l.b16 %v501
    %v546 = vunpack.c.h.b16 %v501
    %v547 = vunpack.c.l.b16 %v502
    %v548 = vunpack.c.h.b16 %v502
    %v549 = vunpack.c.l.b16 %v503
    %v550 = vunpack.c.h.b16 %v503
    %v551 = vunpack.c.l.b16 %v504
    %v552 = vunpack.c.h.b16 %v504
    %v553 = vpack.c.b16 %v523, %v521
    %v554 = vpack.c.b16 %v524, %v522
    %v555 = vpack.c.b16 %v527, %v525
    %v556 = vpack.c.b16 %v528, %v526
    %v557 = vpack.c.b16 %v531, %v529
    %v558 = vpack.c.b16 %v532, %v530
    %v559 = vpack.c.b16 %v535, %v533
    %v560 = vpack.c.b16 %v536, %v534
    %v561 = vpack.c.b16 %v539, %v537
    %v562 = vpack.c.b16 %v540, %v538
    %v563 = vpack.c.b16 %v543, %v541
    %v564 = vpack.c.b16 %v544, %v542
    %v565 = vpack.c.b16 %v547, %v545
    %v566 = vpack.c.b16 %v548, %v546
    %v567 = vpack.c.b16 %v551, %v549
    %v568 = vpack.c.b16 %v552, %v550
    %585 = vmatprep.subr.bf16.mxu0 %v568
    %586 = vmatpush1.bf16.msra.mxu0 %v567
    %587 = vmatprep.subr.bf16.mxu0 %v566
    %588 = vmatpush1.bf16.msra.mxu0 %v565
    %589 = vmatprep.subr.bf16.mxu0 %v564
    %590 = vmatpush1.bf16.msra.mxu0 %v563
    %591 = vmatprep.subr.bf16.mxu0 %v562
    %592 = vmatpush1.bf16.msra.mxu0 %v561
    %593 = vmatprep.subr.bf16.mxu0 %v560
    %594 = vmatpush1.bf16.msra.mxu0 %v559
    %595 = vmatprep.subr.bf16.mxu0 %v558
    %596 = vmatpush1.bf16.msra.mxu0 %v557
    %597 = vmatprep.subr.bf16.mxu0 %v556
    %598 = vmatpush1.bf16.msra.mxu0 %v555
    %599 = vmatprep.subr.bf16.mxu0 %v554
    %600 = vmatpush1.bf16.msra.mxu0 %v553
    %601 = vmatprep.subr.bf16.mxu0 0
    %602 = vmatpush2.bf16.msra.mxu0 0
    %603 = vmatprep.subr.bf16.mxu0 0
    %604 = vmatpush2.bf16.msra.mxu0 0
    %605 = vmatprep.subr.bf16.mxu0 0
    %606 = vmatpush2.bf16.msra.mxu0 0
    %607 = vmatprep.subr.bf16.mxu0 0
    %608 = vmatpush2.bf16.msra.mxu0 0
    %609 = vmatprep.subr.bf16.mxu0 0
    %610 = vmatpush2.bf16.msra.mxu0 0
    %611 = vmatprep.subr.bf16.mxu0 0
    %612 = vmatpush2.bf16.msra.mxu0 0
    %613 = vmatprep.subr.bf16.mxu0 0
    %614 = vmatpush2.bf16.msra.mxu0 0
    %615 = vmatprep.subr.bf16.mxu0 0
    %616 = vmatpush2.bf16.msra.mxu0 0
    %617 = vmatprep.mubr.bf16.mxu0 0
    %618 = vmatmul.mubr.bf16.gmra.mxu0 %v488
    %v619 = vpop.f32.mrf.mxu0
    %v620 = vadd.f32 0.0, %v619
    %v621 = vpop.f32.mrf.mxu0
    %v622 = vadd.f32 0.0, %v621
    %v623 = vpop.f32.mrf.mxu0
    %v624 = vpop.f32.mrf.mxu0
    %625 = vdwg.mxu0
    %v626 = vld [vmem:[%s3 + $0x4] sm:$0x1]
    %v627 = vlaneseq
    %v628 = vshrl.u32 %v627, 7
    %v629 = vsub.s32 0, %v628
    %v630 = vrot.slane %v626, %v629
    %v631 = vadd.f32 %v620, %v630
    %v632 = vmax.f32 %v631, 0.0
    %v633 = vpack.c.bf16 %v632, %v632
    %v634 = vld [vmem:[#allocation2 + $0x200] sm:$0xf]
    %v635 = vld [vmem:[#allocation2 + $0x208] sm:$0xf]
    %v636 = vld [vmem:[#allocation2 + $0x210] sm:$0xf]
    %v637 = vld [vmem:[#allocation2 + $0x218] sm:$0xf]
    %v638 = vld [vmem:[#allocation2 + $0x220] sm:$0xf]
    %v639 = vld [vmem:[#allocation2 + $0x228] sm:$0xf]
    %v640 = vld [vmem:[#allocation2 + $0x230] sm:$0xf]
    %v641 = vld [vmem:[#allocation2 + $0x238] sm:$0xf]
    %v642 = vld [vmem:[#allocation2 + $0x240] sm:$0xf]
    %v643 = vld [vmem:[#allocation2 + $0x248] sm:$0xf]
    %v644 = vld [vmem:[#allocation2 + $0x250] sm:$0xf]
    %v645 = vld [vmem:[#allocation2 + $0x258] sm:$0xf]
    %v646 = vld [vmem:[#allocation2 + $0x260] sm:$0xf]
    %v647 = vld [vmem:[#allocation2 + $0x268] sm:$0xf]
    %v648 = vld [vmem:[#allocation2 + $0x270] sm:$0xf]
    %v649 = vld [vmem:[#allocation2 + $0x278] sm:$0xf]
    %v650 = vld [vmem:[%s3 + $0x5] sm:$0x1]
    %v651 = vlaneseq
    %v652 = vshrl.u32 %v651, 7
    %v653 = vsub.s32 0, %v652
    %v654 = vrot.slane %v650, %v653
    %v671 = vunpack.c.l.b16 %v634
    %v672 = vunpack.c.l.b16 %v635
    %v673 = vunpack.c.l.b16 %v636
    %v674 = vunpack.c.l.b16 %v637
    %v675 = vunpack.c.l.b16 %v638
    %v676 = vunpack.c.l.b16 %v639
    %v677 = vunpack.c.l.b16 %v640
    %v678 = vunpack.c.l.b16 %v641
    %v679 = vunpack.c.l.b16 %v642
    %v680 = vunpack.c.l.b16 %v643
    %v681 = vunpack.c.l.b16 %v644
    %v682 = vunpack.c.l.b16 %v645
    %v683 = vunpack.c.l.b16 %v646
    %v684 = vunpack.c.l.b16 %v647
    %v685 = vunpack.c.l.b16 %v648
    %v686 = vunpack.c.l.b16 %v649
    %v687 = vpack.c.b16 %v672, %v671
    %v688 = vpack.c.b16 %v674, %v673
    %v689 = vpack.c.b16 %v676, %v675
    %v690 = vpack.c.b16 %v678, %v677
    %v691 = vpack.c.b16 %v680, %v679
    %v692 = vpack.c.b16 %v682, %v681
    %v693 = vpack.c.b16 %v684, %v683
    %v694 = vpack.c.b16 %v686, %v685
    %703 = vmatprep.subr.bf16.mxu0 0
    %704 = vmatpush1.bf16.msra.mxu0 %v694
    %705 = vmatprep.subr.bf16.mxu0 0
    %706 = vmatpush1.bf16.msra.mxu0 %v693
    %707 = vmatprep.subr.bf16.mxu0 0
    %708 = vmatpush1.bf16.msra.mxu0 %v692
    %709 = vmatprep.subr.bf16.mxu0 0
    %710 = vmatpush1.bf16.msra.mxu0 %v691
    %711 = vmatprep.subr.bf16.mxu0 0
    %712 = vmatpush1.bf16.msra.mxu0 %v690
    %713 = vmatprep.subr.bf16.mxu0 0
    %714 = vmatpush1.bf16.msra.mxu0 %v689
    %715 = vmatprep.subr.bf16.mxu0 0
    %716 = vmatpush1.bf16.msra.mxu0 %v688
    %717 = vmatprep.subr.bf16.mxu0 0
    %718 = vmatpush1.bf16.msra.mxu0 %v687
    %719 = vmatprep.subr.bf16.mxu0 0
    %720 = vmatpush2.bf16.msra.mxu0 0
    %721 = vmatprep.subr.bf16.mxu0 0
    %722 = vmatpush2.bf16.msra.mxu0 0
    %723 = vmatprep.subr.bf16.mxu0 0
    %724 = vmatpush2.bf16.msra.mxu0 0
    %725 = vmatprep.subr.bf16.mxu0 0
    %726 = vmatpush2.bf16.msra.mxu0 0
    %727 = vmatprep.subr.bf16.mxu0 0
    %728 = vmatpush2.bf16.msra.mxu0 0
    %729 = vmatprep.subr.bf16.mxu0 0
    %730 = vmatpush2.bf16.msra.mxu0 0
    %731 = vmatprep.subr.bf16.mxu0 0
    %732 = vmatpush2.bf16.msra.mxu0 0
    %733 = vmatprep.subr.bf16.mxu0 0
    %734 = vmatpush2.bf16.msra.mxu0 0
    %735 = vmatprep.mubr.bf16.mxu0 0
    %736 = vmatmul.mubr.bf16.gmra.mxu0 %v633
    %v737 = vpop.f32.mrf.mxu0
    %v738 = vadd.f32 %v654, %v737
    %v739 = vpop.f32.mrf.mxu0
    %v740 = vpop.f32.mrf.mxu0
    %v741 = vpop.f32.mrf.mxu0
    %742 = vdwg.mxu0
    %v743 = vadd.f32 %v738, %v622
    %v744 = vmax.f32 %v743, 0.0
    %v745 = vpack.c.bf16 %v744, %v744
    %v746 = vld [vmem:[#allocation5] sm:$0xf]
    %v747 = vld [vmem:[#allocation5 + $0x4] sm:$0xf]
    %v748 = vld [vmem:[#allocation5 + $0x8] sm:$0xf]
    %v749 = vld [vmem:[#allocation5 + $0xc] sm:$0xf]
    %v750 = vld [vmem:[#allocation5 + $0x10] sm:$0xf]
    %v751 = vld [vmem:[#allocation5 + $0x14] sm:$0xf]
    %v752 = vld [vmem:[#allocation5 + $0x18] sm:$0xf]
    %v753 = vld [vmem:[#allocation5 + $0x1c] sm:$0xf]
    %v754 = vld [vmem:[#allocation5 + $0x20] sm:$0xf]
    %v755 = vld [vmem:[#allocation5 + $0x24] sm:$0xf]
    %v756 = vld [vmem:[#allocation5 + $0x28] sm:$0xf]
    %v757 = vld [vmem:[#allocation5 + $0x2c] sm:$0xf]
    %v758 = vld [vmem:[#allocation5 + $0x30] sm:$0xf]
    %v759 = vld [vmem:[#allocation5 + $0x34] sm:$0xf]
    %v760 = vld [vmem:[#allocation5 + $0x38] sm:$0xf]
    %v761 = vld [vmem:[#allocation5 + $0x3c] sm:$0xf]
    %v762 = vld [vmem:[%s5] sm:$0x1]
    %v764 = vlaneseq
    %v765 = vshrl.u32 %v764, 7
    %v766 = vsub.s32 0, %v765
    %v767 = vrot.slane %v762, %v766
    %v785 = vunpack.c.l.b16 %v746
    %v786 = vunpack.c.l.b16 %v747
    %v787 = vunpack.c.l.b16 %v748
    %v788 = vunpack.c.l.b16 %v749
    %v789 = vunpack.c.l.b16 %v750
    %v790 = vunpack.c.l.b16 %v751
    %v791 = vunpack.c.l.b16 %v752
    %v792 = vunpack.c.l.b16 %v753
    %v793 = vunpack.c.l.b16 %v754
    %v794 = vunpack.c.l.b16 %v755
    %v795 = vunpack.c.l.b16 %v756
    %v796 = vunpack.c.l.b16 %v757
    %v797 = vunpack.c.l.b16 %v758
    %v798 = vunpack.c.l.b16 %v759
    %v799 = vunpack.c.l.b16 %v760
    %v800 = vunpack.c.l.b16 %v761
    %v801 = vpack.c.b16 %v786, %v785
    %v802 = vpack.c.b16 %v788, %v787
    %v803 = vpack.c.b16 %v790, %v789
    %v804 = vpack.c.b16 %v792, %v791
    %v805 = vpack.c.b16 %v794, %v793
    %v806 = vpack.c.b16 %v796, %v795
    %v807 = vpack.c.b16 %v798, %v797
    %v808 = vpack.c.b16 %v800, %v799
    %817 = vmatprep.subr.bf16.mxu0 0
    %818 = vmatpush1.bf16.msra.mxu0 %v808
    %819 = vmatprep.subr.bf16.mxu0 0
    %820 = vmatpush1.bf16.msra.mxu0 %v807
    %821 = vmatprep.subr.bf16.mxu0 0
    %822 = vmatpush1.bf16.msra.mxu0 %v806
    %823 = vmatprep.subr.bf16.mxu0 0
    %824 = vmatpush1.bf16.msra.mxu0 %v805
    %825 = vmatprep.subr.bf16.mxu0 0
    %826 = vmatpush1.bf16.msra.mxu0 %v804
    %827 = vmatprep.subr.bf16.mxu0 0
    %828 = vmatpush1.bf16.msra.mxu0 %v803
    %829 = vmatprep.subr.bf16.mxu0 0
    %830 = vmatpush1.bf16.msra.mxu0 %v802
    %831 = vmatprep.subr.bf16.mxu0 0
    %832 = vmatpush1.bf16.msra.mxu0 %v801
    %833 = vmatprep.subr.bf16.mxu0 0
    %834 = vmatpush2.bf16.msra.mxu0 0
    %835 = vmatprep.subr.bf16.mxu0 0
    %836 = vmatpush2.bf16.msra.mxu0 0
    %837 = vmatprep.subr.bf16.mxu0 0
    %838 = vmatpush2.bf16.msra.mxu0 0
    %839 = vmatprep.subr.bf16.mxu0 0
    %840 = vmatpush2.bf16.msra.mxu0 0
    %841 = vmatprep.subr.bf16.mxu0 0
    %842 = vmatpush2.bf16.msra.mxu0 0
    %843 = vmatprep.subr.bf16.mxu0 0
    %844 = vmatpush2.bf16.msra.mxu0 0
    %845 = vmatprep.subr.bf16.mxu0 0
    %846 = vmatpush2.bf16.msra.mxu0 0
    %847 = vmatprep.subr.bf16.mxu0 0
    %848 = vmatpush2.bf16.msra.mxu0 0
    %849 = vmatprep.mubr.bf16.mxu0 0
    %850 = vmatmul.mubr.bf16.gmra.mxu0 %v745
    %v851 = vpop.f32.mrf.mxu0
    %v852 = vadd.f32 %v767, %v851
    %v853 = vpop.f32.mrf.mxu0
    %v854 = vpop.f32.mrf.mxu0
    %v855 = vpop.f32.mrf.mxu0
    %856 = vdwg.mxu0
    %857 = vst [vmem:[#allocation7] sm:$0xff] %v852
    // Predicated region
    $region34: #{forward.1} parent=1 // pred_check
      _
    $region35: #{forward.1} parent=1 // pred_check_branch
      %859 = sbr.rel (0) target = $region37
    $region36: #{forward.1} parent=1 // pred_region
      %s861 = ssub.s32 128, 128
      %862 = vsyncadd [#allocation4], %s861
      %s864 = sshll.u32 [#allocation7], 4
      %s865 = int_to_ptr.vmem [resolvable:$true] %s864
      %867 = dma.vmem_to_hbm [thread:$0]  %s865, 128, %s6, [#allocation4]
    $region37: #{forward.1} parent=1 // pred_fallthru
      _
    // Predicated region
    $region38: #{forward.1} parent=1 // pred_check
      _
    $region39: #{forward.1} parent=1 // pred_check_branch
      %869 = sbr.rel (0) target = $region41
    $region40: #{forward.1} parent=1 // pred_region
      %870 = dma.done [#allocation4], 128
    $region41: #{forward.1} parent=1 // pred_fallthru
      _
    %871 = vsyncpa [#allocation3], 1
    %872 = vsyncpa [#allocation6], 1
    %873 = vsyncpa [#allocation4], 1

</llo_original>
